<compile_context>
chip_gen: v7x
topology: tpu7x:2x2x1
jax: 0.10.0
libtpu: 0.0.40
codegen_flags: <defaults>
</compile_context>

<pallas_src>
import jax
import jax.numpy as jnp
from jax.experimental import pallas as pl
from jax.experimental.pallas import tpu as pltpu


def _round_up(x, m):
    return ((x + m - 1) // m) * m


def _sublane_multiple(dtype):
    # f32 -> 8, bf16 -> 16, int8/fp8 -> 32 (sub-32-bit dtypes pack sublanes).
    return max(8, 32 // jnp.dtype(dtype).itemsize)


def mf_matmul_kernel(xa_ref, b_ref, o_ref):
    """One (tm, tn) output tile of y = xa @ B.

    xa_ref: (tm, rank)   stage-1 result tile (x @ A) for batch tile i
    b_ref : (rank, tn)   out-feature tile j of B
    o_ref : (tm, tn)     output tile (lane-dense, unmasked stores)

    Single MXU matmul with tiny K = rank; operands stay in their native dtype
    and accumulation happens in f32 via preferred_element_type.
    """
    o_ref[...] = jnp.dot(
        xa_ref[...], b_ref[...], preferred_element_type=jnp.float32
    ).astype(o_ref.dtype)


def mf_layer(x, A, B, *, tm=None, tn=None):
    """x: (batch, in_features); A: (in_features, rank); B: (rank, out_features)."""
    batch, in_features = x.shape
    assert A.shape[0] == in_features, (
        "W.reshape(x.shape[1], -1) is only an identity reshape (and (x@A)@B only "
        "equivalent) when shape[0] == x.shape[1]")
    rank = A.shape[1]
    assert B.shape[0] == rank
    out_features = B.shape[1]
    # TODO(synk): shape[0] != x.shape[1] would require materializing and re-tiling
    # W = A @ B across the reshape; not supported (standard FC use-case only).

    compute_dtype = x.dtype

    # Stage 1, hoisted out of the grid per the perf review: a single skinny
    # (batch, in_features) @ (in_features, rank) matmul XLA handles once.
    xa = jnp.dot(x, A, preferred_element_type=jnp.float32).astype(compute_dtype)

    sub = _sublane_multiple(compute_dtype)
    if tm is None:
        tm = min(_round_up(batch, sub), 256)
    else:
        tm = _round_up(tm, sub)

    if tn is None:
        tn = min(_round_up(out_features, 128), 1024)
        # v7x has 2 TensorCores: if the batch axis has only one tile, make sure
        # the out-feature ("parallel") axis has at least two tiles when possible.
        if _round_up(batch, tm) // tm == 1 and out_features > 128:
            tn = min(tn, _round_up(pl.cdiv(out_features, 2), 128))
    else:
        tn = _round_up(tn, 128)

    pb = _round_up(batch, tm)
    po = _round_up(out_features, tn)

    xa_p = xa if pb == batch else jnp.pad(xa, ((0, pb - batch), (0, 0)))
    # NOTE: in a real layer, pad B once at parameter-setup time, not per call.
    B_p = B if po == out_features else jnp.pad(B, ((0, 0), (0, po - out_features)))

    grid = (pb // tm, po // tn)

    flops = 2 * batch * rank * out_features
    bytes_accessed = (xa.size * xa.dtype.itemsize
                      + B.size * B.dtype.itemsize
                      + batch * out_features * x.dtype.itemsize)

    y_p = pl.pallas_call(
        mf_matmul_kernel,
        out_shape=jax.ShapeDtypeStruct((pb, po), x.dtype),
        grid=grid,
        in_specs=[
            pl.BlockSpec((tm, rank), lambda i, j: (i, 0)),
            pl.BlockSpec((rank, tn), lambda i, j: (0, j)),
        ],
        out_specs=pl.BlockSpec((tm, tn), lambda i, j: (i, j)),
        compiler_params=pltpu.CompilerParams(
            dimension_semantics=("parallel", "parallel")),
        cost_estimate=pl.CostEstimate(
            flops=flops, transcendentals=0, bytes_accessed=bytes_accessed),
    )(xa_p, B_p)

    return y_p[:batch, :out_features]


def _reference(x, A, B):
    W = (A @ B).reshape(x.shape[1], -1)
    return x @ W


if __name__ == "__main__":
    key = jax.random.PRNGKey(0)

    # Test 1: shapes consistent with the module's forward:
    #   shape = (in_features, out_features) = (32, 64), rank = 2, x: (8, 32)
    batch, in_features, out_features, rank = 8, 32, 64, 2
    kx, ka, kb, key = jax.random.split(key, 4)
    x = jax.random.normal(kx, (batch, in_features), dtype=jnp.float32)
    A = jax.random.uniform(ka, (in_features, rank), dtype=jnp.float32,
                           minval=-0.1, maxval=0.1)
    B = jax.random.uniform(kb, (rank, out_features), dtype=jnp.float32,
                           minval=-0.1, maxval=0.1)

    y = mf_layer(x, A, B)
    jax.block_until_ready(y)
    y_ref = _reference(x, A, B)
    assert y.shape == (batch, out_features)
    assert jnp.allclose(y, y_ref, atol=1e-5, rtol=1e-5), \
        float(jnp.max(jnp.abs(y - y_ref)))

    # Test 2: exercises padding + a multi-tile (parallel) out-feature grid axis.
    batch2, in2, out2, rank2 = 48, 128, 384, 4
    kx2, ka2, kb2, key = jax.random.split(key, 4)
    x2 = jax.random.normal(kx2, (batch2, in2), dtype=jnp.float32)
    A2 = jax.random.uniform(ka2, (in2, rank2), dtype=jnp.float32,
                            minval=-0.1, maxval=0.1)
    B2 = jax.random.uniform(kb2, (rank2, out2), dtype=jnp.float32,
                            minval=-0.1, maxval=0.1)

    y2 = mf_layer(x2, A2, B2)
    jax.block_until_ready(y2)
    y2_ref = _reference(x2, A2, B2)
    assert y2.shape == (batch2, out2)
    assert jnp.allclose(y2, y2_ref, atol=1e-5, rtol=1e-5), \
        float(jnp.max(jnp.abs(y2 - y2_ref)))

    print("KERNEL_OK")
</pallas_src>

<mosaic_0001>
module attributes {stable_mosaic.version = 11 : i64} {
  func.func @mf_matmul_kernel(%arg0: i32, %arg1: i32, %arg2: memref<8x2xf32, #tpu.memory_space<vmem>>, %arg3: memref<2x128xf32, #tpu.memory_space<vmem>>, %arg4: memref<8x128xf32, #tpu.memory_space<vmem>>) attributes {dimension_semantics = [#tpu.dimension_semantics<parallel>, #tpu.dimension_semantics<parallel>], iteration_bounds = array<i64: 1, 1>, scalar_prefetch = 0 : i64, scratch_operands = 0 : i64, tpu.core_type = #tpu.core_type<tc>, window_params = [{transform_indices = @transform_0, window_bounds = array<i64: 8, 2>}, {transform_indices = @transform_1, window_bounds = array<i64: 2, 128>}, {transform_indices = @transform_2, window_bounds = array<i64: 8, 128>}]} {
    %c0 = arith.constant 0 : index
    %c0_0 = arith.constant 0 : index
    %0 = vector.load %arg2[%c0, %c0_0] : memref<8x2xf32, #tpu.memory_space<vmem>>, vector<8x2xf32>
    %c0_1 = arith.constant 0 : index
    %c0_2 = arith.constant 0 : index
    %1 = vector.load %arg3[%c0_1, %c0_2] : memref<2x128xf32, #tpu.memory_space<vmem>>, vector<2x128xf32>
    %cst = arith.constant dense<0.000000e+00> : vector<8x128xf32>
    %2 = tpu.matmul %0, %1, %cst {dimension_numbers = #tpu.dot_dimension_numbers<[1], [0], [0], [1], [0, 0, 1, 1], [], []>} : vector<8x2xf32>, vector<2x128xf32>, vector<8x128xf32> -> vector<8x128xf32>
    %c0_3 = arith.constant 0 : index
    %c0_4 = arith.constant 0 : index
    %3 = vector.load %arg4[%c0_3, %c0_4] : memref<8x128xf32, #tpu.memory_space<vmem>>, vector<8x128xf32>
    tpu.vector_store %arg4[%c0_3, %c0_4], %2 {strides = array<i32>} : memref<8x128xf32, #tpu.memory_space<vmem>>, vector<8x128xf32>,
    return
  }
  func.func @transform_0(%arg0: i32, %arg1: i32) -> (i32, i32) {
    %c0_i32 = arith.constant 0 : i32
    %c0_i32_0 = arith.constant 0 : i32
    return %arg0, %c0_i32 : i32, i32
  }
  func.func @transform_1(%arg0: i32, %arg1: i32) -> (i32, i32) {
    %c0_i32 = arith.constant 0 : i32
    %c0_i32_0 = arith.constant 0 : i32
    return %c0_i32, %arg1 : i32, i32
  }
  func.func @transform_2(%arg0: i32, %arg1: i32) -> (i32, i32) {
    %c0_i32 = arith.constant 0 : i32
    return %arg0, %arg1 : i32, i32
  }
}

</mosaic_0001>

<llo_original>
// kernel: tpu_custom_call.1
$region0: #{tpu_custom_call.1}
  #allocation0 [shape = 'u32[]', space=smem, size = 0x4, offset = 0x4, fixed_abs, tag = 'smem constant byte address 0x4 - core index']
  #allocation1 [shape = 'u32[144,128]{1,0:T(1,128)}', space=vmem, size = 0x12000, scoped, tag = 'internal scratch']
  %s0 = inlined_call_operand.vmem [shape: f32[8,2], index: 0, kind: input, shape index: {}]
  %s1 = inlined_call_operand.vmem [shape: f32[2,128], index: 1, kind: input, shape index: {}]
  %s2 = inlined_call_operand.hbm [shape: f32[8,128], index: 2, kind: output, shape index: {}]
  %s3 = sld [smem:[#allocation0]]
  $region18: #{tpu_custom_call.1} parent=0
    _
  %s5 = ssub.s32 1, %s3
  %s6 = scalar_select 0, %s5, %s3
  $region1: #{tpu_custom_call.1} parent=0
    #allocation2 [shape = 'u8[4096]{0}', space=vmem, size = 0x1000, scoped, tag = 'output window, operand 0, single buffered']
    #allocation3 [shape = 's32[1]{0}', space=sflag, size = 0x4, scoped, tag = 'scoped memory for tpu_custom_call.1']
    %7 = vsyncpa [#allocation3], 0
    // Predicated region
    $region2: #{tpu_custom_call.1} parent=1 // pred_check
      _
    $region3: #{tpu_custom_call.1} parent=1 // pred_check_branch
      %9 = sbr.rel (0) target = $region5
    $region4: #{tpu_custom_call.1} parent=1 // pred_region
      _
    $region5: #{tpu_custom_call.1} parent=1 // pred_fallthru
      _
    // Predicated region
    $region6: #{tpu_custom_call.1} parent=1 // pred_check
      _
    $region7: #{tpu_custom_call.1} parent=1 // pred_check_branch
      %11 = sbr.rel (0) target = $region9
    $region8: #{tpu_custom_call.1} parent=1 // pred_region
      _
    $region9: #{tpu_custom_call.1} parent=1 // pred_fallthru
      _
    %v12 = vld [vmem:[%s0] sm:$0xff]
    %v13 = vld [vmem:[%s1] sm:$0x3]
    %vm14 = vcmask 15360
    %v16 = vsel %vm14, %v12, 0
    %vm18 = vcmask 1041408
    %v20 = vsel %vm18, %v13, 0
    %22 = vmatprep.subr.mxu0 0.0
    %23 = vmatpush1.msra.mxu0 %v20
    %24 = vmatprep.subr.mxu0 0.0
    %25 = vmatpush1.msra.mxu0 0.0
    %26 = vmatprep.subr.mxu0 0.0
    %27 = vmatpush1.msra.mxu0 0.0
    %28 = vmatprep.subr.mxu0 0.0
    %29 = vmatpush1.msra.mxu0 0.0
    %30 = vmatprep.subr.mxu0 0.0
    %31 = vmatpush1.msra.mxu0 0.0
    %32 = vmatprep.subr.mxu0 0.0
    %33 = vmatpush1.msra.mxu0 0.0
    %34 = vmatprep.subr.mxu0 0.0
    %35 = vmatpush1.msra.mxu0 0.0
    %36 = vmatprep.subr.mxu0 0.0
    %37 = vmatpush1.msra.mxu0 0.0
    %38 = vmatprep.subr.mxu0 0.0
    %39 = vmatpush1.msra.mxu0 0.0
    %40 = vmatprep.subr.mxu0 0.0
    %41 = vmatpush1.msra.mxu0 0.0
    %42 = vmatprep.subr.mxu0 0.0
    %43 = vmatpush1.msra.mxu0 0.0
    %44 = vmatprep.subr.mxu0 0.0
    %45 = vmatpush1.msra.mxu0 0.0
    %46 = vmatprep.subr.mxu0 0.0
    %47 = vmatpush1.msra.mxu0 0.0
    %48 = vmatprep.subr.mxu0 0.0
    %49 = vmatpush1.msra.mxu0 0.0
    %50 = vmatprep.subr.mxu0 0.0
    %51 = vmatpush1.msra.mxu0 0.0
    %52 = vmatprep.subr.mxu0 0.0
    %53 = vmatpush1.msra.mxu0 0.0
    %54 = vmatprep.subr.mxu0 0.0
    %55 = vmatpush1.msra.mxu0 0.0
    %56 = vmatprep.subr.mxu0 0.0
    %57 = vmatpush1.msra.mxu0 0.0
    %58 = vmatprep.subr.mxu0 0.0
    %59 = vmatpush1.msra.mxu0 0.0
    %60 = vmatprep.subr.mxu0 0.0
    %61 = vmatpush1.msra.mxu0 0.0
    %62 = vmatprep.subr.mxu0 0.0
    %63 = vmatpush1.msra.mxu0 0.0
    %64 = vmatprep.subr.mxu0 0.0
    %65 = vmatpush1.msra.mxu0 0.0
    %66 = vmatprep.subr.mxu0 0.0
    %67 = vmatpush1.msra.mxu0 0.0
    %68 = vmatprep.subr.mxu0 0.0
    %69 = vmatpush1.msra.mxu0 0.0
    %70 = vmatprep.subr.mxu0 0.0
    %71 = vmatpush1.msra.mxu0 0.0
    %72 = vmatprep.subr.mxu0 0.0
    %73 = vmatpush1.msra.mxu0 0.0
    %74 = vmatprep.subr.mxu0 0.0
    %75 = vmatpush1.msra.mxu0 0.0
    %76 = vmatprep.subr.mxu0 0.0
    %77 = vmatpush1.msra.mxu0 0.0
    %78 = vmatprep.subr.mxu0 0.0
    %79 = vmatpush1.msra.mxu0 0.0
    %80 = vmatprep.subr.mxu0 0.0
    %81 = vmatpush1.msra.mxu0 0.0
    %82 = vmatprep.subr.mxu0 0.0
    %83 = vmatpush1.msra.mxu0 0.0
    %84 = vmatprep.subr.mxu0 0.0
    %85 = vmatpush1.msra.mxu0 0.0
    %86 = vmatprep.mubr.f32.mxu0 0.0
    %87 = vmatmul.mubr.f32.gmra.mrb[0].mxu0 %v16
    %v88 = vpop.f32.mrb[0].mxu0
    %v89 = vadd.f32 0.0, %v88
    %v90 = vpop.f32.mrb[0].mxu0
    %91 = vdwg.mxu0
    %92 = vst [vmem:[#allocation2] sm:$0xff] %v89
    // Predicated region
    $region10: #{tpu_custom_call.1} parent=1 // pred_check
      _
    $region11: #{tpu_custom_call.1} parent=1 // pred_check_branch
      %94 = sbr.rel (0) target = $region13
    $region12: #{tpu_custom_call.1} parent=1 // pred_region
      %s96 = ssub.s32 128, 128
      %97 = vsyncadd [#allocation3], %s96
      %s99 = sshll.u32 [#allocation2], 4
      %s100 = int_to_ptr.vmem [resolvable:$true] %s99
      %102 = dma.vmem_to_hbm [thread:$0]  %s100, 128, %s2, [#allocation3]
    $region13: #{tpu_custom_call.1} parent=1 // pred_fallthru
      _
    // Predicated region
    $region14: #{tpu_custom_call.1} parent=1 // pred_check
      _
    $region15: #{tpu_custom_call.1} parent=1 // pred_check_branch
      %104 = sbr.rel (0) target = $region17
    $region16: #{tpu_custom_call.1} parent=1 // pred_region
      %105 = dma.done [#allocation3], 128
    $region17: #{tpu_custom_call.1} parent=1 // pred_fallthru
      _
    %106 = vsyncpa [#allocation3], 1

</llo_original>
